<compile_context>
chip_gen: v6e
topology: v6e:2x2x1
jax: 0.10.0
libtpu: 0.0.40
codegen_flags: <defaults>
</compile_context>

<pallas_src>
import functools

import jax
import jax.numpy as jnp
from jax.experimental import pallas as pl
from jax.experimental.pallas import tpu as pltpu


def _pixel_shuffle_kernel(x_ref, o_ref, *, r):
    # x_ref: (1, r*r, TH, W)   the r*r input planes of one output channel
    # o_ref: (1, 1, TH*r, W*r) the corresponding shuffled output tile
    th = x_ref.shape[2]
    w = x_ref.shape[3]
    hr = th * r
    wr = w * r

    # One-hot scatter matrices built from 2-D iotas (VPU-only work):
    #   row scatter  P_h_i[d, h] = 1  iff  d == h*r + i   -> (Hr, TH)
    #   col scatter  P_w_j[s, d] = 1  iff  d == s*r + j   -> (W,  Wr)
    h_dst = jax.lax.broadcasted_iota(jnp.int32, (hr, th), 0)
    h_src = jax.lax.broadcasted_iota(jnp.int32, (hr, th), 1)
    w_src = jax.lax.broadcasted_iota(jnp.int32, (w, wr), 0)
    w_dst = jax.lax.broadcasted_iota(jnp.int32, (w, wr), 1)

    out = jnp.zeros((hr, wr), jnp.float32)
    for i in range(r):                                            # static unroll
        p_h = (h_dst == h_src * r + i).astype(jnp.float32)        # (Hr, TH)
        acc = jnp.zeros((th, wr), jnp.float32)
        for j in range(r):                                        # static unroll
            p_w = (w_dst == w_src * r + j).astype(jnp.float32)    # (W, Wr)
            plane = x_ref[0, i * r + j].astype(jnp.float32)       # (TH, W)
            # scatter columns w -> w*r + j
            acc = acc + jnp.dot(plane, p_w, preferred_element_type=jnp.float32)
        # scatter rows h -> h*r + i
        out = out + jnp.dot(p_h, acc, preferred_element_type=jnp.float32)

    o_ref[0, 0] = out.astype(o_ref.dtype)


def _pick_h_tile(h, w, r, itemsize):
    """Largest H tile that divides H, is a multiple of 8 (or the full H),
    and keeps one input block under ~1 MiB (comfortable double-buffering,
    enough grid steps to pipeline)."""
    if h % 8 != 0:
        return h
    budget = 1 << 20  # bytes per input block
    candidates = [d for d in range(8, h + 1, 8) if h % d == 0]
    fitting = [d for d in candidates if d * w * r * r * itemsize <= budget]
    return max(fitting) if fitting else min(candidates)


def pixel_shuffle(x, r):
    """PixelShuffle forward: (N, C, H, W) -> (N, C/(r*r), H*r, W*r)."""
    n, c, h, w = x.shape
    if c % (r * r) != 0:
        raise ValueError(
            f"Input channels ({c}) must be divisible by square of upscale "
            f"factor ({r * r})")
    c_out = c // (r * r)
    th = _pick_h_tile(h, w, r, jnp.dtype(x.dtype).itemsize)
    grid = (n, c_out, h // th)

    return pl.pallas_call(
        functools.partial(_pixel_shuffle_kernel, r=r),
        out_shape=jax.ShapeDtypeStruct((n, c_out, h * r, w * r), x.dtype),
        grid=grid,
        in_specs=[
            pl.BlockSpec((1, r * r, th, w), lambda b, co, ht: (b, co, ht, 0)),
        ],
        out_specs=pl.BlockSpec(
            (1, 1, th * r, w * r), lambda b, co, ht: (b, co, ht, 0)),
        compiler_params=pltpu.CompilerParams(
            dimension_semantics=("parallel", "parallel", "parallel")),
    )(x)


def _reference_pixel_shuffle(x, r):
    # Mirrors the PyTorch module exactly (NCHW).
    n, c, h, w = x.shape
    y = x.reshape(n, c // (r * r), r, r, h, w)
    y = jnp.transpose(y, (0, 1, 4, 2, 5, 3))
    return y.reshape(n, c // (r * r), h * r, w * r)


if __name__ == "__main__":
    N, C, H, W = 2, 4, 16, 16
    r = 2  # C must be divisible by r*r

    key = jax.random.PRNGKey(0)
    x = jax.random.normal(key, (N, C, H, W), dtype=jnp.float32)

    out = jax.block_until_ready(pixel_shuffle(x, r))
    assert out.shape == (N, C // (r * r), H * r, W * r), out.shape

    ref = jax.block_until_ready(_reference_pixel_shuffle(x, r))
    max_err = float(jnp.max(jnp.abs(out - ref)))
    assert jnp.allclose(out, ref, atol=1e-3, rtol=1e-3), max_err

    print("KERNEL_OK")
</pallas_src>

<mosaic_0001>
module attributes {stable_mosaic.version = 11 : i64} {
  func.func @_pixel_shuffle_kernel(%arg0: i32, %arg1: i32, %arg2: i32, %arg3: memref<1x4x16x16xf32, #tpu.memory_space<vmem>>, %arg4: memref<1x1x32x32xf32, #tpu.memory_space<vmem>>) attributes {dimension_semantics = [#tpu.dimension_semantics<parallel>, #tpu.dimension_semantics<parallel>, #tpu.dimension_semantics<parallel>], iteration_bounds = array<i64: 2, 1, 1>, scalar_prefetch = 0 : i64, scratch_operands = 0 : i64, tpu.core_type = #tpu.core_type<tc>, window_params = [{transform_indices = @transform_0, window_bounds = array<i64: 1, 4, 16, 16>}, {transform_indices = @transform_1, window_bounds = array<i64: 1, 1, 32, 32>}]} {
    %0 = tpu.iota {dimensions = array<i32: 0>} : vector<32x16xi32>
    %1 = tpu.iota {dimensions = array<i32: 1>} : vector<32x16xi32>
    %2 = tpu.iota {dimensions = array<i32: 0>} : vector<16x32xi32>
    %3 = tpu.iota {dimensions = array<i32: 1>} : vector<16x32xi32>
    %cst = arith.constant 0.000000e+00 : f32
    %4 = vector.broadcast %cst : f32 to vector<32x32xf32>
    %c2_i32 = arith.constant 2 : i32
    %5 = vector.broadcast %c2_i32 : i32 to vector<32x16xi32>
    %6 = arith.muli %1, %5 : vector<32x16xi32>
    %c0_i32 = arith.constant 0 : i32
    %7 = vector.broadcast %c0_i32 : i32 to vector<32x16xi32>
    %8 = arith.addi %6, %7 : vector<32x16xi32>
    %9 = arith.cmpi eq, %0, %8 : vector<32x16xi32>
    %10 = arith.extui %9 : vector<32x16xi1> to vector<32x16xi32>
    %11 = arith.sitofp %10 : vector<32x16xi32> to vector<32x16xf32>
    %cst_0 = arith.constant 0.000000e+00 : f32
    %12 = vector.broadcast %cst_0 : f32 to vector<16x32xf32>
    %c2_i32_1 = arith.constant 2 : i32
    %13 = vector.broadcast %c2_i32_1 : i32 to vector<16x32xi32>
    %14 = arith.muli %2, %13 : vector<16x32xi32>
    %c0_i32_2 = arith.constant 0 : i32
    %15 = vector.broadcast %c0_i32_2 : i32 to vector<16x32xi32>
    %16 = arith.addi %14, %15 : vector<16x32xi32>
    %17 = arith.cmpi eq, %3, %16 : vector<16x32xi32>
    %18 = arith.extui %17 : vector<16x32xi1> to vector<16x32xi32>
    %19 = arith.sitofp %18 : vector<16x32xi32> to vector<16x32xf32>
    %c0 = arith.constant 0 : index
    %c0_3 = arith.constant 0 : index
    %c0_4 = arith.constant 0 : index
    %c0_5 = arith.constant 0 : index
    %20 = vector.load %arg3[%c0, %c0_3, %c0_4, %c0_5] : memref<1x4x16x16xf32, #tpu.memory_space<vmem>>, vector<1x1x16x16xf32>
    %21 = vector.shape_cast %20 : vector<1x1x16x16xf32> to vector<16x16xf32>
    %cst_6 = arith.constant dense<0.000000e+00> : vector<16x32xf32>
    %22 = tpu.matmul %21, %19, %cst_6 {dimension_numbers = #tpu.dot_dimension_numbers<[1], [0], [0], [1], [0, 0, 1, 1], [], []>} : vector<16x16xf32>, vector<16x32xf32>, vector<16x32xf32> -> vector<16x32xf32>
    %23 = arith.addf %12, %22 : vector<16x32xf32>
    %c2_i32_7 = arith.constant 2 : i32
    %24 = vector.broadcast %c2_i32_7 : i32 to vector<16x32xi32>
    %25 = arith.muli %2, %24 : vector<16x32xi32>
    %c1_i32 = arith.constant 1 : i32
    %26 = vector.broadcast %c1_i32 : i32 to vector<16x32xi32>
    %27 = arith.addi %25, %26 : vector<16x32xi32>
    %28 = arith.cmpi eq, %3, %27 : vector<16x32xi32>
    %29 = arith.extui %28 : vector<16x32xi1> to vector<16x32xi32>
    %30 = arith.sitofp %29 : vector<16x32xi32> to vector<16x32xf32>
    %c0_8 = arith.constant 0 : index
    %c1 = arith.constant 1 : index
    %c0_9 = arith.constant 0 : index
    %c0_10 = arith.constant 0 : index
    %31 = vector.load %arg3[%c0_8, %c1, %c0_9, %c0_10] : memref<1x4x16x16xf32, #tpu.memory_space<vmem>>, vector<1x1x16x16xf32>
    %32 = vector.shape_cast %31 : vector<1x1x16x16xf32> to vector<16x16xf32>
    %cst_11 = arith.constant dense<0.000000e+00> : vector<16x32xf32>
    %33 = tpu.matmul %32, %30, %cst_11 {dimension_numbers = #tpu.dot_dimension_numbers<[1], [0], [0], [1], [0, 0, 1, 1], [], []>} : vector<16x16xf32>, vector<16x32xf32>, vector<16x32xf32> -> vector<16x32xf32>
    %34 = arith.addf %23, %33 : vector<16x32xf32>
    %cst_12 = arith.constant dense<0.000000e+00> : vector<32x32xf32>
    %35 = tpu.matmul %11, %34, %cst_12 {dimension_numbers = #tpu.dot_dimension_numbers<[1], [0], [0], [1], [0, 0, 1, 1], [], []>} : vector<32x16xf32>, vector<16x32xf32>, vector<32x32xf32> -> vector<32x32xf32>
    %36 = arith.addf %4, %35 : vector<32x32xf32>
    %c2_i32_13 = arith.constant 2 : i32
    %37 = vector.broadcast %c2_i32_13 : i32 to vector<32x16xi32>
    %38 = arith.muli %1, %37 : vector<32x16xi32>
    %c1_i32_14 = arith.constant 1 : i32
    %39 = vector.broadcast %c1_i32_14 : i32 to vector<32x16xi32>
    %40 = arith.addi %38, %39 : vector<32x16xi32>
    %41 = arith.cmpi eq, %0, %40 : vector<32x16xi32>
    %42 = arith.extui %41 : vector<32x16xi1> to vector<32x16xi32>
    %43 = arith.sitofp %42 : vector<32x16xi32> to vector<32x16xf32>
    %cst_15 = arith.constant 0.000000e+00 : f32
    %44 = vector.broadcast %cst_15 : f32 to vector<16x32xf32>
    %c2_i32_16 = arith.constant 2 : i32
    %45 = vector.broadcast %c2_i32_16 : i32 to vector<16x32xi32>
    %46 = arith.muli %2, %45 : vector<16x32xi32>
    %c0_i32_17 = arith.constant 0 : i32
    %47 = vector.broadcast %c0_i32_17 : i32 to vector<16x32xi32>
    %48 = arith.addi %46, %47 : vector<16x32xi32>
    %49 = arith.cmpi eq, %3, %48 : vector<16x32xi32>
    %50 = arith.extui %49 : vector<16x32xi1> to vector<16x32xi32>
    %51 = arith.sitofp %50 : vector<16x32xi32> to vector<16x32xf32>
    %c0_18 = arith.constant 0 : index
    %c2 = arith.constant 2 : index
    %c0_19 = arith.constant 0 : index
    %c0_20 = arith.constant 0 : index
    %52 = vector.load %arg3[%c0_18, %c2, %c0_19, %c0_20] : memref<1x4x16x16xf32, #tpu.memory_space<vmem>>, vector<1x1x16x16xf32>
    %53 = vector.shape_cast %52 : vector<1x1x16x16xf32> to vector<16x16xf32>
    %cst_21 = arith.constant dense<0.000000e+00> : vector<16x32xf32>
    %54 = tpu.matmul %53, %51, %cst_21 {dimension_numbers = #tpu.dot_dimension_numbers<[1], [0], [0], [1], [0, 0, 1, 1], [], []>} : vector<16x16xf32>, vector<16x32xf32>, vector<16x32xf32> -> vector<16x32xf32>
    %55 = arith.addf %44, %54 : vector<16x32xf32>
    %c2_i32_22 = arith.constant 2 : i32
    %56 = vector.broadcast %c2_i32_22 : i32 to vector<16x32xi32>
    %57 = arith.muli %2, %56 : vector<16x32xi32>
    %c1_i32_23 = arith.constant 1 : i32
    %58 = vector.broadcast %c1_i32_23 : i32 to vector<16x32xi32>
    %59 = arith.addi %57, %58 : vector<16x32xi32>
    %60 = arith.cmpi eq, %3, %59 : vector<16x32xi32>
    %61 = arith.extui %60 : vector<16x32xi1> to vector<16x32xi32>
    %62 = arith.sitofp %61 : vector<16x32xi32> to vector<16x32xf32>
    %c0_24 = arith.constant 0 : index
    %c3 = arith.constant 3 : index
    %c0_25 = arith.constant 0 : index
    %c0_26 = arith.constant 0 : index
    %63 = vector.load %arg3[%c0_24, %c3, %c0_25, %c0_26] : memref<1x4x16x16xf32, #tpu.memory_space<vmem>>, vector<1x1x16x16xf32>
    %64 = vector.shape_cast %63 : vector<1x1x16x16xf32> to vector<16x16xf32>
    %cst_27 = arith.constant dense<0.000000e+00> : vector<16x32xf32>
    %65 = tpu.matmul %64, %62, %cst_27 {dimension_numbers = #tpu.dot_dimension_numbers<[1], [0], [0], [1], [0, 0, 1, 1], [], []>} : vector<16x16xf32>, vector<16x32xf32>, vector<16x32xf32> -> vector<16x32xf32>
    %66 = arith.addf %55, %65 : vector<16x32xf32>
    %cst_28 = arith.constant dense<0.000000e+00> : vector<32x32xf32>
    %67 = tpu.matmul %43, %66, %cst_28 {dimension_numbers = #tpu.dot_dimension_numbers<[1], [0], [0], [1], [0, 0, 1, 1], [], []>} : vector<32x16xf32>, vector<16x32xf32>, vector<32x32xf32> -> vector<32x32xf32>
    %68 = arith.addf %36, %67 : vector<32x32xf32>
    %c0_29 = arith.constant 0 : index
    %c0_30 = arith.constant 0 : index
    %c0_31 = arith.constant 0 : index
    %c0_32 = arith.constant 0 : index
    %69 = vector.load %arg4[%c0_29, %c0_30, %c0_31, %c0_32] : memref<1x1x32x32xf32, #tpu.memory_space<vmem>>, vector<1x1x32x32xf32>
    %70 = vector.shape_cast %69 : vector<1x1x32x32xf32> to vector<32x32xf32>
    %71 = vector.shape_cast %68 : vector<32x32xf32> to vector<1x1x32x32xf32>
    tpu.vector_store %arg4[%c0_29, %c0_30, %c0_31, %c0_32], %71 {strides = array<i32>} : memref<1x1x32x32xf32, #tpu.memory_space<vmem>>, vector<1x1x32x32xf32>,
    return
  }
  func.func @transform_0(%arg0: i32, %arg1: i32, %arg2: i32) -> (i32, i32, i32, i32) {
    %c0_i32 = arith.constant 0 : i32
    %c0_i32_0 = arith.constant 0 : i32
    return %arg0, %arg1, %arg2, %c0_i32 : i32, i32, i32, i32
  }
  func.func @transform_1(%arg0: i32, %arg1: i32, %arg2: i32) -> (i32, i32, i32, i32) {
    %c0_i32 = arith.constant 0 : i32
    %c0_i32_0 = arith.constant 0 : i32
    return %arg0, %arg1, %arg2, %c0_i32 : i32, i32, i32, i32
  }
}

</mosaic_0001>

<llo_original>
// kernel: tpu_custom_call.1
$region0: #{tpu_custom_call.1}
  #allocation0 [shape = 'u32[]', space=smem, size = 0x4, offset = 0x4, fixed_abs, tag = 'smem constant byte address 0x4 - core index']
  #allocation1 [shape = 'u32[144,128]{1,0:T(1,128)}', space=vmem, size = 0x12000, scoped, tag = 'internal scratch']
  %s0 = inlined_call_operand.hbm [shape: f32[2,4,16,16], index: 0, kind: input, shape index: {}]
  %s1 = inlined_call_operand.hbm [shape: f32[2,1,32,32], index: 1, kind: output, shape index: {}]
  %s2 = sld [smem:[#allocation0]]
  $region41: #{tpu_custom_call.1} parent=0
    _
  %s4 = ssub.s32 1, %s2
  %s5 = scalar_select 0, %s4, %s2
  $region1: #{tpu_custom_call.1} parent=0
    #allocation2 [shape = 'u8[65536]{0}', space=vmem, size = 0x10000, scoped, tag = 'input window, operand 0']
    #allocation3 [shape = 's32[2]{0}', space=sflag, size = 0x8, scoped, tag = 'scoped memory for tpu_custom_call.1']
    #allocation4 [shape = 's32[2]{0}', space=sflag, size = 0x8, scoped, tag = 'scoped memory for tpu_custom_call.1']
    #allocation5 [shape = 'u8[32768]{0}', space=vmem, size = 0x8000, scoped, tag = 'output window, operand 0']
    %6 = vsyncpa [#allocation3], 0
    %s7 = scalar_lea.sflag [#allocation3], 1
    %8 = vsyncpa %s7, 0
    %9 = vsyncpa [#allocation4], 0
    %s10 = scalar_lea.sflag [#allocation4], 1
    %11 = vsyncpa %s10, 0
    loop: start=0, step=1, limit=4
    $region2: #{tpu_custom_call.1} parent=1 // loop_pre_header
      _
    $region3: #{tpu_custom_call.1} parent=1 // loop_header
      %s13 = sphi 0, %s17
      %p14 = scmp.ge.s32.totalorder %s13, 4
      %s20 = sphi 0, %s39
      %s21 = sphi 0, %s35
      %s22 = sphi 0, %s31
      %s23 = sphi 0, %s20
      %s24 = sphi 0, %s21
      %s25 = sphi 0, %s22
      %s26 = sphi 0, %s23
      %s27 = sphi 0, %s24
      %s28 = sphi 0, %s25
      %s46 = sphi 0, %s48
      %s49 = sphi 0, %s46
      %s50 = sphi 0, %s49
      %s66 = sphi 0, %s50
      %s76 = sphi 0, %s78
      %s79 = sphi 0, %s76
      %s80 = sphi 0, %s79
      %s96 = sphi 0, %s80
    $region4: #{tpu_custom_call.1} parent=1 // loop_header_branch
      %16 = sbr.rel (%p14) target = $region8
    $region5: #{tpu_custom_call.1} parent=1 // loop_body
      %s18 = ssub.s32 %s13, 1
      %s19 = ssub.s32 %s13, 2
      %s29 = sadd.s32 1, %s22
      %p30 = scmp.ge.s32.totalorder %s29, 1
      %s31 = scalar_select %p30, 0, %s29
      %s32 = sadd.s32 1, %s21
      %s33 = scalar_select %p30, %s32, %s21
      %p34 = scmp.ge.s32.totalorder %s33, 1
      %s35 = scalar_select %p34, 0, %s33
      %s36 = sadd.s32 1, %s20
      %s37 = scalar_select %p34, %s36, %s20
      %p38 = scmp.ge.s32.totalorder %s37, 2
      %s39 = scalar_select %p38, 0, %s37
      %s40 = ssub.s32 %s20, %s39
      %s41 = ssub.s32 %s21, %s35
      %s42 = sor.u32 %s40, %s41
      %s43 = ssub.s32 %s22, %s31
      %s44 = sor.u32 %s42, %s43
      %p45 = scmp.eq.s32.totalorder %s44, 0
      %s47 = sadd.s32 %s46, 1
      %s48 = scalar_select %p45, %s46, %s47
      %p51 = pneg %p45
      %p52 = scmp.eq.s32.totalorder %s13, 1
      %p53 = por %p51, %p52
      %p54 = scmp.ne.s32.totalorder %s46, %s49
      %p55 = scmp.eq.s32.totalorder %s13, 0
      %p56 = por %p54, %p55
      %p57 = scmp.ne.s32.totalorder %s46, %s49
      %p58 = scmp.eq.s32.totalorder %s18, 1
      %p59 = por %p57, %p58
      %p60 = scmp.ne.s32.totalorder %s49, %s50
      %p61 = scmp.eq.s32.totalorder %s18, 0
      %p62 = por %p60, %p61
      %p63 = scmp.ne.s32.totalorder %s49, %s50
      %p64 = scmp.eq.s32.totalorder %s19, 1
      %p65 = por %p63, %p64
      %p67 = scmp.ne.s32.totalorder %s50, %s66
      %p68 = scmp.eq.s32.totalorder %s19, 0
      %p69 = por %p67, %p68
      %s70 = ssub.s32 %s20, %s39
      %s71 = ssub.s32 %s21, %s35
      %s72 = sor.u32 %s70, %s71
      %s73 = ssub.s32 %s22, %s31
      %s74 = sor.u32 %s72, %s73
      %p75 = scmp.eq.s32.totalorder %s74, 0
      %s77 = sadd.s32 %s76, 1
      %s78 = scalar_select %p75, %s76, %s77
      %p81 = pneg %p75
      %p82 = scmp.eq.s32.totalorder %s13, 1
      %p83 = por %p81, %p82
      %p84 = scmp.ne.s32.totalorder %s76, %s79
      %p85 = scmp.eq.s32.totalorder %s13, 0
      %p86 = por %p84, %p85
      %p87 = scmp.ne.s32.totalorder %s76, %s79
      %p88 = scmp.eq.s32.totalorder %s18, 1
      %p89 = por %p87, %p88
      %p90 = scmp.ne.s32.totalorder %s79, %s80
      %p91 = scmp.eq.s32.totalorder %s18, 0
      %p92 = por %p90, %p91
      %p93 = scmp.ne.s32.totalorder %s79, %s80
      %p94 = scmp.eq.s32.totalorder %s19, 1
      %p95 = por %p93, %p94
      %p97 = scmp.ne.s32.totalorder %s80, %s96
      %p98 = scmp.eq.s32.totalorder %s19, 0
      %p99 = por %p97, %p98
      %p100 = scmp.le.s32.totalorder 1, %s13
      %p101 = scmp.lt.s32.totalorder %s13, 3
      %p102 = pnand %p100, %p101
      %p103 = pneg %p102
      // Predicated region
      $region9: #{tpu_custom_call.1} parent=5 // pred_check
        _
      $region10: #{tpu_custom_call.1} parent=5 // pred_check_branch
        %105 = sbr.rel (%p102) target = $region12
      $region11: #{tpu_custom_call.1} parent=5 // pred_region
        %s106 = ssub.s32 %s13, 1
      $region12: #{tpu_custom_call.1} parent=5 // pred_fallthru
        _
      %p107 = scmp.lt.s32.totalorder %s13, 2
      // Predicated region
      $region13: #{tpu_custom_call.1} parent=5 // pred_check
        %p108 = pneg %p107
      $region14: #{tpu_custom_call.1} parent=5 // pred_check_branch
        %110 = sbr.rel (%p108) target = $region16
      $region15: #{tpu_custom_call.1} parent=5 // pred_region
        // Predicated region
        $region17: #{tpu_custom_call.1} parent=15 // pred_check
          %p111 = pneg %p56
        $region18: #{tpu_custom_call.1} parent=15 // pred_check_branch
          %113 = sbr.rel (%p111) target = $region20
        $region19: #{tpu_custom_call.1} parent=15 // pred_region
          %s114 = sand.u32 %s46, 1
          %s115 = scalar_lea.sflag [#allocation3], %s114
          %s116 = sand.u32 %s46, 1
          %s117 = smul.addr %s116, 64
          %s118 = scalar_lea.vmem [#allocation2], %s117
          %s119 = smul.u32 4, %s21
          %s120 = smul.u32 2, %s22
          %s122 = ssub.s32 1024, 1024
          %123 = vsyncadd %s115, %s122
          %s124 = smul.addr %s119, 2
          %s125 = sadd.s32 %s120, %s124
          %s126 = smul.addr %s20, 8
          %s127 = sadd.s32 %s125, %s126
          %s128 = smul.addr %s127, 128
          %s129 = scalar_lea.hbm %s0, %s128
          %s130 = sshll.u32 %s118, 4
          %s131 = int_to_ptr.vmem [resolvable:$true] %s130
          %136 = dma.hbm_to_vmem [thread:$0]  %s129, 1024, %s131, %s115, 128, 128, 8
        $region20: #{tpu_custom_call.1} parent=15 // pred_fallthru
          _
      $region16: #{tpu_custom_call.1} parent=5 // pred_fallthru
        _
      %p137 = scmp.le.s32.totalorder 1, %s13
      %p138 = scmp.lt.s32.totalorder %s13, 3
      %p139 = pnand %p137, %p138
      %p140 = pneg %p139
      // Predicated region
      $region21: #{tpu_custom_call.1} parent=5 // pred_check
        _
      $region22: #{tpu_custom_call.1} parent=5 // pred_check_branch
        %142 = sbr.rel (%p139) target = $region24
      $region23: #{tpu_custom_call.1} parent=5 // pred_region
        %s143 = ssub.s32 %s13, 1
        %s144 = sand.u32 %s49, 1
        %s145 = scalar_lea.sflag [#allocation3], %s144
        %s146 = sand.u32 %s49, 1
        %s147 = smul.addr %s146, 64
        %s148 = scalar_lea.vmem [#allocation2], %s147
        // Predicated region
        $region25: #{tpu_custom_call.1} parent=23 // pred_check
          %p149 = pneg %p62
        $region26: #{tpu_custom_call.1} parent=23 // pred_check_branch
          %151 = sbr.rel (%p149) target = $region28
        $region27: #{tpu_custom_call.1} parent=23 // pred_region
          %152 = dma.done %s145, 1024
        $region28: #{tpu_custom_call.1} parent=23 // pred_fallthru
          _
        %s153 = sand.u32 %s49, 1
        %s154 = scalar_lea.sflag [#allocation3], %s153
        %s155 = sand.u32 %s49, 1
        %s156 = smul.addr %s155, 64
        %s157 = scalar_lea.vmem [#allocation2], %s156
        %p158 = pneg %p62
        %p159 = pneg %p59
        %p160 = pneg %p92
        %p161 = pneg %p89
        %s162 = sand.u32 %s79, 1
        %s163 = scalar_lea.sflag [#allocation4], %s162
        %s164 = sand.u32 %s79, 1
        %s165 = smul.addr %s164, 32
        %s166 = scalar_lea.vmem [#allocation5], %s165
        %s167 = smul.u32 4, %s24
        %s168 = smul.u32 2, %s25
        %s169 = smul.u32 4, %s25
        %v170 = vlaneseq
        %v171 = vshrl.u32 %v170, 7
        %v172 = vadd.s32 %v171, 8
        %v173 = vadd.s32 %v171, 16
        %v174 = vadd.s32 %v171, 24
        %v175 = vlaneseq
        %v176 = vand.u32 %v175, 127
        %v177 = vmul.u32 %v176, 2
        %vm178 = vcmp.eq.s32.totalorder %v171, %v177
        %vm179 = vcmp.eq.s32.totalorder %v172, %v177
        %vm180 = vcmp.eq.s32.totalorder %v173, %v177
        %vm181 = vcmp.eq.s32.totalorder %v174, %v177
        %v182 = vsel %vm178, 1, 0
        %v183 = vsel %vm179, 1, 0
        %v184 = vsel %vm180, 1, 0
        %v185 = vsel %vm181, 1, 0
        %v186 = vcvt.s32.f32 %v182
        %v187 = vcvt.s32.f32 %v183
        %v188 = vcvt.s32.f32 %v184
        %v189 = vcvt.s32.f32 %v185
        %v190 = vmul.u32 %v171, 2
        %v191 = vmul.u32 %v172, 2
        %vm192 = vcmp.eq.s32.totalorder %v176, %v190
        %vm193 = vcmp.eq.s32.totalorder %v176, %v191
        %v194 = vsel %vm192, 1, 0
        %v195 = vsel %vm193, 1, 0
        %v196 = vcvt.s32.f32 %v194
        %v197 = vcvt.s32.f32 %v195
        %v198 = vld [vmem:[%s148] sm:$0xff]
        %v199 = vld [vmem:[%s148 + $0x8] sm:$0xff]
        %v200 = vadd.s32 %v190, 1
        %v201 = vadd.s32 %v191, 1
        %vm202 = vcmp.eq.s32.totalorder %v176, %v200
        %vm203 = vcmp.eq.s32.totalorder %v176, %v201
        %v204 = vsel %vm202, 1, 0
        %v205 = vsel %vm203, 1, 0
        %v206 = vcvt.s32.f32 %v204
        %v207 = vcvt.s32.f32 %v205
        %s208 = scalar_lea.vmem %s148, 16 [#allocation2]
        %v209 = vld [vmem:[%s208] sm:$0xff]
        %v210 = vld [vmem:[%s208 + $0x8] sm:$0xff]
        %vm211 = vcmask 130048
        %v213 = vsel %vm211, %v209, 0
        %v216 = vsel %vm211, %v210, 0
        %218 = vmatprep.subr.mxu0 0.0
        %219 = vmatpush1.msra.mxu0 0.0
        %220 = vmatprep.subr.mxu0 0.0
        %221 = vmatpush1.msra.mxu0 0.0
        %222 = vmatprep.subr.mxu0 0.0
        %223 = vmatpush1.msra.mxu0 0.0
        %224 = vmatprep.subr.mxu0 0.0
        %225 = vmatpush1.msra.mxu0 0.0
        %226 = vmatprep.subr.mxu0 0.0
        %227 = vmatpush1.msra.mxu0 0.0
        %228 = vmatprep.subr.mxu0 0.0
        %229 = vmatpush1.msra.mxu0 0.0
        %230 = vmatprep.subr.mxu0 0.0
        %231 = vmatpush1.msra.mxu0 0.0
        %232 = vmatprep.subr.mxu0 0.0
        %233 = vmatpush1.msra.mxu0 0.0
        %234 = vmatprep.subr.mxu0 0.0
        %235 = vmatpush1.msra.mxu0 0.0
        %236 = vmatprep.subr.mxu0 0.0
        %237 = vmatpush1.msra.mxu0 0.0
        %238 = vmatprep.subr.mxu0 0.0
        %239 = vmatpush1.msra.mxu0 0.0
        %240 = vmatprep.subr.mxu0 0.0
        %241 = vmatpush1.msra.mxu0 0.0
        %242 = vmatprep.subr.mxu0 0.0
        %243 = vmatpush1.msra.mxu0 0.0
        %244 = vmatprep.subr.mxu0 0.0
        %245 = vmatpush1.msra.mxu0 0.0
        %246 = vmatprep.subr.mxu0 0.0
        %247 = vmatpush1.msra.mxu0 %v207
        %248 = vmatprep.subr.mxu0 0.0
        %249 = vmatpush1.msra.mxu0 %v206
        %250 = vmatprep.subr.mxu0 0.0
        %251 = vmatpush2.msra.mxu0 0.0
        %252 = vmatprep.subr.mxu0 0.0
        %253 = vmatpush2.msra.mxu0 0.0
        %254 = vmatprep.subr.mxu0 0.0
        %255 = vmatpush2.msra.mxu0 0.0
        %256 = vmatprep.subr.mxu0 0.0
        %257 = vmatpush2.msra.mxu0 0.0
        %258 = vmatprep.subr.mxu0 0.0
        %259 = vmatpush2.msra.mxu0 0.0
        %260 = vmatprep.subr.mxu0 0.0
        %261 = vmatpush2.msra.mxu0 0.0
        %262 = vmatprep.subr.mxu0 0.0
        %263 = vmatpush2.msra.mxu0 0.0
        %264 = vmatprep.subr.mxu0 0.0
        %265 = vmatpush2.msra.mxu0 0.0
        %266 = vmatprep.subr.mxu0 0.0
        %267 = vmatpush2.msra.mxu0 0.0
        %268 = vmatprep.subr.mxu0 0.0
        %269 = vmatpush2.msra.mxu0 0.0
        %270 = vmatprep.subr.mxu0 0.0
        %271 = vmatpush2.msra.mxu0 0.0
        %272 = vmatprep.subr.mxu0 0.0
        %273 = vmatpush2.msra.mxu0 0.0
        %274 = vmatprep.subr.mxu0 0.0
        %275 = vmatpush2.msra.mxu0 0.0
        %276 = vmatprep.subr.mxu0 0.0
        %277 = vmatpush2.msra.mxu0 0.0
        %278 = vmatprep.subr.mxu0 0.0
        %279 = vmatpush2.msra.mxu0 0.0
        %280 = vmatprep.subr.mxu0 0.0
        %281 = vmatpush2.msra.mxu0 0.0
        %282 = vmatprep.mubr.f32.mxu0 0.0
        %283 = vmatmul.mubr.f32.gmra.mxu0 %v213
        %v284 = vpop.f32.mrf.mxu0
        %v285 = vadd.f32 0.0, %v284
        %v286 = vpop.f32.mrf.mxu0
        %287 = vmatprep.mubr.f32.mxu0 0.0
        %288 = vmatmul.mubr.f32.gmra.mxu0 %v216
        %v289 = vpop.f32.mrf.mxu0
        %v290 = vadd.f32 0.0, %v289
        %v291 = vpop.f32.mrf.mxu0
        %292 = vdwg.mxu0
        %v294 = vsel %vm211, %v198, 0
        %v297 = vsel %vm211, %v199, 0
        %299 = vmatprep.subr.mxu0 0.0
        %300 = vmatpush1.msra.mxu0 0.0
        %301 = vmatprep.subr.mxu0 0.0
        %302 = vmatpush1.msra.mxu0 0.0
        %303 = vmatprep.subr.mxu0 0.0
        %304 = vmatpush1.msra.mxu0 0.0
        %305 = vmatprep.subr.mxu0 0.0
        %306 = vmatpush1.msra.mxu0 0.0
        %307 = vmatprep.subr.mxu0 0.0
        %308 = vmatpush1.msra.mxu0 0.0
        %309 = vmatprep.subr.mxu0 0.0
        %310 = vmatpush1.msra.mxu0 0.0
        %311 = vmatprep.subr.mxu0 0.0
        %312 = vmatpush1.msra.mxu0 0.0
        %313 = vmatprep.subr.mxu0 0.0
        %314 = vmatpush1.msra.mxu0 0.0
        %315 = vmatprep.subr.mxu0 0.0
        %316 = vmatpush1.msra.mxu0 0.0
        %317 = vmatprep.subr.mxu0 0.0
        %318 = vmatpush1.msra.mxu0 0.0
        %319 = vmatprep.subr.mxu0 0.0
        %320 = vmatpush1.msra.mxu0 0.0
        %321 = vmatprep.subr.mxu0 0.0
        %322 = vmatpush1.msra.mxu0 0.0
        %323 = vmatprep.subr.mxu0 0.0
        %324 = vmatpush1.msra.mxu0 0.0
        %325 = vmatprep.subr.mxu0 0.0
        %326 = vmatpush1.msra.mxu0 0.0
        %327 = vmatprep.subr.mxu0 0.0
        %328 = vmatpush1.msra.mxu0 %v197
        %329 = vmatprep.subr.mxu0 0.0
        %330 = vmatpush1.msra.mxu0 %v196
        %331 = vmatprep.subr.mxu0 0.0
        %332 = vmatpush2.msra.mxu0 0.0
        %333 = vmatprep.subr.mxu0 0.0
        %334 = vmatpush2.msra.mxu0 0.0
        %335 = vmatprep.subr.mxu0 0.0
        %336 = vmatpush2.msra.mxu0 0.0
        %337 = vmatprep.subr.mxu0 0.0
        %338 = vmatpush2.msra.mxu0 0.0
        %339 = vmatprep.subr.mxu0 0.0
        %340 = vmatpush2.msra.mxu0 0.0
        %341 = vmatprep.subr.mxu0 0.0
        %342 = vmatpush2.msra.mxu0 0.0
        %343 = vmatprep.subr.mxu0 0.0
        %344 = vmatpush2.msra.mxu0 0.0
        %345 = vmatprep.subr.mxu0 0.0
        %346 = vmatpush2.msra.mxu0 0.0
        %347 = vmatprep.subr.mxu0 0.0
        %348 = vmatpush2.msra.mxu0 0.0
        %349 = vmatprep.subr.mxu0 0.0
        %350 = vmatpush2.msra.mxu0 0.0
        %351 = vmatprep.subr.mxu0 0.0
        %352 = vmatpush2.msra.mxu0 0.0
        %353 = vmatprep.subr.mxu0 0.0
        %354 = vmatpush2.msra.mxu0 0.0
        %355 = vmatprep.subr.mxu0 0.0
        %356 = vmatpush2.msra.mxu0 0.0
        %357 = vmatprep.subr.mxu0 0.0
        %358 = vmatpush2.msra.mxu0 0.0
        %359 = vmatprep.subr.mxu0 0.0
        %360 = vmatpush2.msra.mxu0 0.0
        %361 = vmatprep.subr.mxu0 0.0
        %362 = vmatpush2.msra.mxu0 0.0
        %363 = vmatprep.mubr.f32.mxu0 0.0
        %364 = vmatmul.mubr.f32.gmra.mxu0 %v294
        %v365 = vpop.f32.mrf.mxu0
        %v366 = vadd.f32 %v285, %v365
        %v367 = vpop.f32.mrf.mxu0
        %368 = vmatprep.mubr.f32.mxu0 0.0
        %369 = vmatmul.mubr.f32.gmra.mxu0 %v297
        %v370 = vpop.f32.mrf.mxu0
        %v371 = vadd.f32 %v290, %v370
        %v372 = vpop.f32.mrf.mxu0
        %373 = vdwg.mxu0
        %v374 = vadd.s32 %v177, 1
        %vm375 = vcmp.eq.s32.totalorder %v171, %v374
        %vm376 = vcmp.eq.s32.totalorder %v172, %v374
        %vm377 = vcmp.eq.s32.totalorder %v173, %v374
        %vm378 = vcmp.eq.s32.totalorder %v174, %v374
        %v379 = vsel %vm375, 1, 0
        %v380 = vsel %vm376, 1, 0
        %v381 = vsel %vm377, 1, 0
        %v382 = vsel %vm378, 1, 0
        %v383 = vcvt.s32.f32 %v379
        %v384 = vcvt.s32.f32 %v380
        %v385 = vcvt.s32.f32 %v381
        %v386 = vcvt.s32.f32 %v382
        %s387 = scalar_lea.vmem %s148, 32 [#allocation2]
        %v388 = vld [vmem:[%s387] sm:$0xff]
        %v389 = vld [vmem:[%s387 + $0x8] sm:$0xff]
        %s390 = scalar_lea.vmem %s148, 48 [#allocation2]
        %v391 = vld [vmem:[%s390] sm:$0xff]
        %v392 = vld [vmem:[%s390 + $0x8] sm:$0xff]
        %v394 = vsel %vm211, %v391, 0
        %v397 = vsel %vm211, %v392, 0
        %399 = vmatprep.subr.mxu0 0.0
        %400 = vmatpush1.msra.mxu0 0.0
        %401 = vmatprep.subr.mxu0 0.0
        %402 = vmatpush1.msra.mxu0 0.0
        %403 = vmatprep.subr.mxu0 0.0
        %404 = vmatpush1.msra.mxu0 0.0
        %405 = vmatprep.subr.mxu0 0.0
        %406 = vmatpush1.msra.mxu0 0.0
        %407 = vmatprep.subr.mxu0 0.0
        %408 = vmatpush1.msra.mxu0 0.0
        %409 = vmatprep.subr.mxu0 0.0
        %410 = vmatpush1.msra.mxu0 0.0
        %411 = vmatprep.subr.mxu0 0.0
        %412 = vmatpush1.msra.mxu0 0.0
        %413 = vmatprep.subr.mxu0 0.0
        %414 = vmatpush1.msra.mxu0 0.0
        %415 = vmatprep.subr.mxu0 0.0
        %416 = vmatpush1.msra.mxu0 0.0
        %417 = vmatprep.subr.mxu0 0.0
        %418 = vmatpush1.msra.mxu0 0.0
        %419 = vmatprep.subr.mxu0 0.0
        %420 = vmatpush1.msra.mxu0 0.0
        %421 = vmatprep.subr.mxu0 0.0
        %422 = vmatpush1.msra.mxu0 0.0
        %423 = vmatprep.subr.mxu0 0.0
        %424 = vmatpush1.msra.mxu0 0.0
        %425 = vmatprep.subr.mxu0 0.0
        %426 = vmatpush1.msra.mxu0 0.0
        %427 = vmatprep.subr.mxu0 0.0
        %428 = vmatpush1.msra.mxu0 %v207
        %429 = vmatprep.subr.mxu0 0.0
        %430 = vmatpush1.msra.mxu0 %v206
        %431 = vmatprep.subr.mxu0 0.0
        %432 = vmatpush2.msra.mxu0 0.0
        %433 = vmatprep.subr.mxu0 0.0
        %434 = vmatpush2.msra.mxu0 0.0
        %435 = vmatprep.subr.mxu0 0.0
        %436 = vmatpush2.msra.mxu0 0.0
        %437 = vmatprep.subr.mxu0 0.0
        %438 = vmatpush2.msra.mxu0 0.0
        %439 = vmatprep.subr.mxu0 0.0
        %440 = vmatpush2.msra.mxu0 0.0
        %441 = vmatprep.subr.mxu0 0.0
        %442 = vmatpush2.msra.mxu0 0.0
        %443 = vmatprep.subr.mxu0 0.0
        %444 = vmatpush2.msra.mxu0 0.0
        %445 = vmatprep.subr.mxu0 0.0
        %446 = vmatpush2.msra.mxu0 0.0
        %447 = vmatprep.subr.mxu0 0.0
        %448 = vmatpush2.msra.mxu0 0.0
        %449 = vmatprep.subr.mxu0 0.0
        %450 = vmatpush2.msra.mxu0 0.0
        %451 = vmatprep.subr.mxu0 0.0
        %452 = vmatpush2.msra.mxu0 0.0
        %453 = vmatprep.subr.mxu0 0.0
        %454 = vmatpush2.msra.mxu0 0.0
        %455 = vmatprep.subr.mxu0 0.0
        %456 = vmatpush2.msra.mxu0 0.0
        %457 = vmatprep.subr.mxu0 0.0
        %458 = vmatpush2.msra.mxu0 0.0
        %459 = vmatprep.subr.mxu0 0.0
        %460 = vmatpush2.msra.mxu0 0.0
        %461 = vmatprep.subr.mxu0 0.0
        %462 = vmatpush2.msra.mxu0 0.0
        %463 = vmatprep.mubr.f32.mxu0 0.0
        %464 = vmatmul.mubr.f32.gmra.mxu0 %v394
        %v465 = vpop.f32.mrf.mxu0
        %v466 = vadd.f32 0.0, %v465
        %v467 = vpop.f32.mrf.mxu0
        %468 = vmatprep.mubr.f32.mxu0 0.0
        %469 = vmatmul.mubr.f32.gmra.mxu0 %v397
        %v470 = vpop.f32.mrf.mxu0
        %v471 = vadd.f32 0.0, %v470
        %v472 = vpop.f32.mrf.mxu0
        %473 = vdwg.mxu0
        %v475 = vsel %vm211, %v388, 0
        %v478 = vsel %vm211, %v389, 0
        %480 = vmatprep.subr.mxu0 0.0
        %481 = vmatpush1.msra.mxu0 0.0
        %482 = vmatprep.subr.mxu0 0.0
        %483 = vmatpush1.msra.mxu0 0.0
        %484 = vmatprep.subr.mxu0 0.0
        %485 = vmatpush1.msra.mxu0 0.0
        %486 = vmatprep.subr.mxu0 0.0
        %487 = vmatpush1.msra.mxu0 0.0
        %488 = vmatprep.subr.mxu0 0.0
        %489 = vmatpush1.msra.mxu0 0.0
        %490 = vmatprep.subr.mxu0 0.0
        %491 = vmatpush1.msra.mxu0 0.0
        %492 = vmatprep.subr.mxu0 0.0
        %493 = vmatpush1.msra.mxu0 0.0
        %494 = vmatprep.subr.mxu0 0.0
        %495 = vmatpush1.msra.mxu0 0.0
        %496 = vmatprep.subr.mxu0 0.0
        %497 = vmatpush1.msra.mxu0 0.0
        %498 = vmatprep.subr.mxu0 0.0
        %499 = vmatpush1.msra.mxu0 0.0
        %500 = vmatprep.subr.mxu0 0.0
        %501 = vmatpush1.msra.mxu0 0.0
        %502 = vmatprep.subr.mxu0 0.0
        %503 = vmatpush1.msra.mxu0 0.0
        %504 = vmatprep.subr.mxu0 0.0
        %505 = vmatpush1.msra.mxu0 0.0
        %506 = vmatprep.subr.mxu0 0.0
        %507 = vmatpush1.msra.mxu0 0.0
        %508 = vmatprep.subr.mxu0 0.0
        %509 = vmatpush1.msra.mxu0 %v197
        %510 = vmatprep.subr.mxu0 0.0
        %511 = vmatpush1.msra.mxu0 %v196
        %512 = vmatprep.subr.mxu0 0.0
        %513 = vmatpush2.msra.mxu0 0.0
        %514 = vmatprep.subr.mxu0 0.0
        %515 = vmatpush2.msra.mxu0 0.0
        %516 = vmatprep.subr.mxu0 0.0
        %517 = vmatpush2.msra.mxu0 0.0
        %518 = vmatprep.subr.mxu0 0.0
        %519 = vmatpush2.msra.mxu0 0.0
        %520 = vmatprep.subr.mxu0 0.0
        %521 = vmatpush2.msra.mxu0 0.0
        %522 = vmatprep.subr.mxu0 0.0
        %523 = vmatpush2.msra.mxu0 0.0
        %524 = vmatprep.subr.mxu0 0.0
        %525 = vmatpush2.msra.mxu0 0.0
        %526 = vmatprep.subr.mxu0 0.0
        %527 = vmatpush2.msra.mxu0 0.0
        %528 = vmatprep.subr.mxu0 0.0
        %529 = vmatpush2.msra.mxu0 0.0
        %530 = vmatprep.subr.mxu0 0.0
        %531 = vmatpush2.msra.mxu0 0.0
        %532 = vmatprep.subr.mxu0 0.0
        %533 = vmatpush2.msra.mxu0 0.0
        %534 = vmatprep.subr.mxu0 0.0
        %535 = vmatpush2.msra.mxu0 0.0
        %536 = vmatprep.subr.mxu0 0.0
        %537 = vmatpush2.msra.mxu0 0.0
        %538 = vmatprep.subr.mxu0 0.0
        %539 = vmatpush2.msra.mxu0 0.0
        %540 = vmatprep.subr.mxu0 0.0
        %541 = vmatpush2.msra.mxu0 0.0
        %542 = vmatprep.subr.mxu0 0.0
        %543 = vmatpush2.msra.mxu0 0.0
        %544 = vmatprep.mubr.f32.mxu0 0.0
        %545 = vmatmul.mubr.f32.gmra.mxu0 %v475
        %v546 = vpop.f32.mrf.mxu0
        %v547 = vadd.f32 %v466, %v546
        %v548 = vpop.f32.mrf.mxu0
        %549 = vmatprep.mubr.f32.mxu0 0.0
        %550 = vmatmul.mubr.f32.gmra.mxu0 %v478
        %v551 = vpop.f32.mrf.mxu0
        %v552 = vadd.f32 %v471, %v551
        %v553 = vpop.f32.mrf.mxu0
        %554 = vdwg.mxu0
        %v556 = vsel %vm211, %v383, 0
        %v559 = vsel %vm211, %v384, 0
        %v562 = vsel %vm211, %v385, 0
        %v565 = vsel %vm211, %v386, 0
        %567 = vmatprep.subr.mxu0 0.0
        %568 = vmatpush1.msra.mxu0 0.0
        %569 = vmatprep.subr.mxu0 0.0
        %570 = vmatpush1.msra.mxu0 0.0
        %571 = vmatprep.subr.mxu0 0.0
        %572 = vmatpush1.msra.mxu0 0.0
        %573 = vmatprep.subr.mxu0 0.0
        %574 = vmatpush1.msra.mxu0 0.0
        %575 = vmatprep.subr.mxu0 0.0
        %576 = vmatpush1.msra.mxu0 0.0
        %577 = vmatprep.subr.mxu0 0.0
        %578 = vmatpush1.msra.mxu0 0.0
        %579 = vmatprep.subr.mxu0 0.0
        %580 = vmatpush1.msra.mxu0 0.0
        %581 = vmatprep.subr.mxu0 0.0
        %582 = vmatpush1.msra.mxu0 0.0
        %583 = vmatprep.subr.mxu0 0.0
        %584 = vmatpush1.msra.mxu0 0.0
        %585 = vmatprep.subr.mxu0 0.0
        %586 = vmatpush1.msra.mxu0 0.0
        %587 = vmatprep.subr.mxu0 0.0
        %588 = vmatpush1.msra.mxu0 0.0
        %589 = vmatprep.subr.mxu0 0.0
        %590 = vmatpush1.msra.mxu0 0.0
        %591 = vmatprep.subr.mxu0 0.0
        %592 = vmatpush1.msra.mxu0 0.0
        %593 = vmatprep.subr.mxu0 0.0
        %594 = vmatpush1.msra.mxu0 0.0
        %595 = vmatprep.subr.mxu0 0.0
        %596 = vmatpush1.msra.mxu0 %v552
        %597 = vmatprep.subr.mxu0 0.0
        %598 = vmatpush1.msra.mxu0 %v547
        %599 = vmatprep.subr.mxu0 0.0
        %600 = vmatpush2.msra.mxu0 0.0
        %601 = vmatprep.subr.mxu0 0.0
        %602 = vmatpush2.msra.mxu0 0.0
        %603 = vmatprep.subr.mxu0 0.0
        %604 = vmatpush2.msra.mxu0 0.0
        %605 = vmatprep.subr.mxu0 0.0
        %606 = vmatpush2.msra.mxu0 0.0
        %607 = vmatprep.subr.mxu0 0.0
        %608 = vmatpush2.msra.mxu0 0.0
        %609 = vmatprep.subr.mxu0 0.0
        %610 = vmatpush2.msra.mxu0 0.0
        %611 = vmatprep.subr.mxu0 0.0
        %612 = vmatpush2.msra.mxu0 0.0
        %613 = vmatprep.subr.mxu0 0.0
        %614 = vmatpush2.msra.mxu0 0.0
        %615 = vmatprep.subr.mxu0 0.0
        %616 = vmatpush2.msra.mxu0 0.0
        %617 = vmatprep.subr.mxu0 0.0
        %618 = vmatpush2.msra.mxu0 0.0
        %619 = vmatprep.subr.mxu0 0.0
        %620 = vmatpush2.msra.mxu0 0.0
        %621 = vmatprep.subr.mxu0 0.0
        %622 = vmatpush2.msra.mxu0 0.0
        %623 = vmatprep.subr.mxu0 0.0
        %624 = vmatpush2.msra.mxu0 0.0
        %625 = vmatprep.subr.mxu0 0.0
        %626 = vmatpush2.msra.mxu0 0.0
        %627 = vmatprep.subr.mxu0 0.0
        %628 = vmatpush2.msra.mxu0 0.0
        %629 = vmatprep.subr.mxu0 0.0
        %630 = vmatpush2.msra.mxu0 0.0
        %631 = vmatprep.mubr.f32.mxu0 0.0
        %632 = vmatmul.mubr.f32.gmra.mxu0 %v556
        %v633 = vpop.f32.mrf.mxu0
        %v634 = vadd.f32 0.0, %v633
        %v635 = vpop.f32.mrf.mxu0
        %636 = vmatprep.mubr.f32.mxu0 0.0
        %637 = vmatmul.mubr.f32.gmra.mxu0 %v559
        %v638 = vpop.f32.mrf.mxu0
        %v639 = vadd.f32 0.0, %v638
        %v640 = vpop.f32.mrf.mxu0
        %641 = vmatprep.mubr.f32.mxu0 0.0
        %642 = vmatmul.mubr.f32.gmra.mxu0 %v562
        %v643 = vpop.f32.mrf.mxu0
        %v644 = vadd.f32 0.0, %v643
        %v645 = vpop.f32.mrf.mxu0
        %646 = vmatprep.mubr.f32.mxu0 0.0
        %647 = vmatmul.mubr.f32.gmra.mxu0 %v565
        %v648 = vpop.f32.mrf.mxu0
        %v649 = vadd.f32 0.0, %v648
        %v650 = vpop.f32.mrf.mxu0
        %651 = vdwg.mxu0
        %v653 = vsel %vm211, %v186, 0
        %v656 = vsel %vm211, %v187, 0
        %v659 = vsel %vm211, %v188, 0
        %v662 = vsel %vm211, %v189, 0
        %664 = vmatprep.subr.mxu0 0.0
        %665 = vmatpush1.msra.mxu0 0.0
        %666 = vmatprep.subr.mxu0 0.0
        %667 = vmatpush1.msra.mxu0 0.0
        %668 = vmatprep.subr.mxu0 0.0
        %669 = vmatpush1.msra.mxu0 0.0
        %670 = vmatprep.subr.mxu0 0.0
        %671 = vmatpush1.msra.mxu0 0.0
        %672 = vmatprep.subr.mxu0 0.0
        %673 = vmatpush1.msra.mxu0 0.0
        %674 = vmatprep.subr.mxu0 0.0
        %675 = vmatpush1.msra.mxu0 0.0
        %676 = vmatprep.subr.mxu0 0.0
        %677 = vmatpush1.msra.mxu0 0.0
        %678 = vmatprep.subr.mxu0 0.0
        %679 = vmatpush1.msra.mxu0 0.0
        %680 = vmatprep.subr.mxu0 0.0
        %681 = vmatpush1.msra.mxu0 0.0
        %682 = vmatprep.subr.mxu0 0.0
        %683 = vmatpush1.msra.mxu0 0.0
        %684 = vmatprep.subr.mxu0 0.0
        %685 = vmatpush1.msra.mxu0 0.0
        %686 = vmatprep.subr.mxu0 0.0
        %687 = vmatpush1.msra.mxu0 0.0
        %688 = vmatprep.subr.mxu0 0.0
        %689 = vmatpush1.msra.mxu0 0.0
        %690 = vmatprep.subr.mxu0 0.0
        %691 = vmatpush1.msra.mxu0 0.0
        %692 = vmatprep.subr.mxu0 0.0
        %693 = vmatpush1.msra.mxu0 %v371
        %694 = vmatprep.subr.mxu0 0.0
        %695 = vmatpush1.msra.mxu0 %v366
        %696 = vmatprep.subr.mxu0 0.0
        %697 = vmatpush2.msra.mxu0 0.0
        %698 = vmatprep.subr.mxu0 0.0
        %699 = vmatpush2.msra.mxu0 0.0
        %700 = vmatprep.subr.mxu0 0.0
        %701 = vmatpush2.msra.mxu0 0.0
        %702 = vmatprep.subr.mxu0 0.0
        %703 = vmatpush2.msra.mxu0 0.0
        %704 = vmatprep.subr.mxu0 0.0
        %705 = vmatpush2.msra.mxu0 0.0
        %706 = vmatprep.subr.mxu0 0.0
        %707 = vmatpush2.msra.mxu0 0.0
        %708 = vmatprep.subr.mxu0 0.0
        %709 = vmatpush2.msra.mxu0 0.0
        %710 = vmatprep.subr.mxu0 0.0
        %711 = vmatpush2.msra.mxu0 0.0
        %712 = vmatprep.subr.mxu0 0.0
        %713 = vmatpush2.msra.mxu0 0.0
        %714 = vmatprep.subr.mxu0 0.0
        %715 = vmatpush2.msra.mxu0 0.0
        %716 = vmatprep.subr.mxu0 0.0
        %717 = vmatpush2.msra.mxu0 0.0
        %718 = vmatprep.subr.mxu0 0.0
        %719 = vmatpush2.msra.mxu0 0.0
        %720 = vmatprep.subr.mxu0 0.0
        %721 = vmatpush2.msra.mxu0 0.0
        %722 = vmatprep.subr.mxu0 0.0
        %723 = vmatpush2.msra.mxu0 0.0
        %724 = vmatprep.subr.mxu0 0.0
        %725 = vmatpush2.msra.mxu0 0.0
        %726 = vmatprep.subr.mxu0 0.0
        %727 = vmatpush2.msra.mxu0 0.0
        %728 = vmatprep.mubr.f32.mxu0 0.0
        %729 = vmatmul.mubr.f32.gmra.mxu0 %v653
        %v730 = vpop.f32.mrf.mxu0
        %v731 = vadd.f32 %v634, %v730
        %v732 = vpop.f32.mrf.mxu0
        %733 = vmatprep.mubr.f32.mxu0 0.0
        %734 = vmatmul.mubr.f32.gmra.mxu0 %v656
        %v735 = vpop.f32.mrf.mxu0
        %v736 = vadd.f32 %v639, %v735
        %v737 = vpop.f32.mrf.mxu0
        %738 = vmatprep.mubr.f32.mxu0 0.0
        %739 = vmatmul.mubr.f32.gmra.mxu0 %v659
        %v740 = vpop.f32.mrf.mxu0
        %v741 = vadd.f32 %v644, %v740
        %v742 = vpop.f32.mrf.mxu0
        %743 = vmatprep.mubr.f32.mxu0 0.0
        %744 = vmatmul.mubr.f32.gmra.mxu0 %v662
        %v745 = vpop.f32.mrf.mxu0
        %v746 = vadd.f32 %v649, %v745
        %v747 = vpop.f32.mrf.mxu0
        %748 = vdwg.mxu0
        %vm749 = vcmask 261120
        %750 = vst.msk [vmem:[%s166] sm:$0xff] %vm749, %v731
        %751 = vst.msk [vmem:[%s166 + $0x8] sm:$0xff] %vm749, %v736
        %752 = vst.msk [vmem:[%s166 + $0x10] sm:$0xff] %vm749, %v741
        %753 = vst.msk [vmem:[%s166 + $0x18] sm:$0xff] %vm749, %v746
        %s754 = sand.u32 %s79, 1
        %s755 = scalar_lea.sflag [#allocation4], %s754
        %s756 = sand.u32 %s79, 1
        %s757 = smul.addr %s756, 32
        %s758 = scalar_lea.vmem [#allocation5], %s757
        // Predicated region
        $region29: #{tpu_custom_call.1} parent=23 // pred_check
          %p759 = pneg %p89
        $region30: #{tpu_custom_call.1} parent=23 // pred_check_branch
          %761 = sbr.rel (%p759) target = $region32
        $region31: #{tpu_custom_call.1} parent=23 // pred_region
          %s762 = smul.u32 4, %s25
          %s764 = ssub.s32 512, 512
          %765 = vsyncadd %s755, %s764
          %s766 = smul.addr %s24, 4
          %s767 = sadd.s32 %s762, %s766
          %s768 = smul.addr %s23, 4
          %s769 = sadd.s32 %s767, %s768
          %s770 = smul.addr %s769, 128
          %s771 = scalar_lea.hbm %s1, %s770
          %s772 = sshll.u32 %s758, 4
          %s773 = int_to_ptr.vmem [resolvable:$true] %s772
          %778 = dma.vmem_to_hbm [thread:$0]  %s773, 512, %s771, %s755, 128, 128, 8
        $region32: #{tpu_custom_call.1} parent=23 // pred_fallthru
          _
      $region24: #{tpu_custom_call.1} parent=5 // pred_fallthru
        _
      %p779 = scmp.le.s32.totalorder 2, %s13
      // Predicated region
      $region33: #{tpu_custom_call.1} parent=5 // pred_check
        %p780 = pneg %p779
      $region34: #{tpu_custom_call.1} parent=5 // pred_check_branch
        %782 = sbr.rel (%p780) target = $region36
      $region35: #{tpu_custom_call.1} parent=5 // pred_region
        %s783 = ssub.s32 %s13, 2
        // Predicated region
        $region37: #{tpu_custom_call.1} parent=35 // pred_check
          %p784 = pneg %p95
        $region38: #{tpu_custom_call.1} parent=35 // pred_check_branch
          %786 = sbr.rel (%p784) target = $region40
        $region39: #{tpu_custom_call.1} parent=35 // pred_region
          %s787 = sand.u32 %s80, 1
          %s788 = scalar_lea.sflag [#allocation4], %s787
          %s789 = sand.u32 %s80, 1
          %s790 = smul.addr %s789, 32
          %s791 = scalar_lea.vmem [#allocation5], %s790
          %792 = dma.done %s788, 512
        $region40: #{tpu_custom_call.1} parent=35 // pred_fallthru
          _
      $region36: #{tpu_custom_call.1} parent=5 // pred_fallthru
        _
    $region6: #{tpu_custom_call.1} parent=1 // loop_footer
      %s17 = sadd.s32 1, %s13
    $region7: #{tpu_custom_call.1} parent=1 // loop_footer_branch
      %12 = sbr.rel target = $region3
    $region8: #{tpu_custom_call.1} parent=1 // loop_exit
      _
    %793 = vsyncpa [#allocation3], 1
    %s794 = scalar_lea.sflag [#allocation3], 1
    %795 = vsyncpa %s794, 1
    %796 = vsyncpa [#allocation4], 1
    %s797 = scalar_lea.sflag [#allocation4], 1
    %798 = vsyncpa %s797, 1

</llo_original>
